<compile_context>
chip_gen: v7x
topology: tpu7x:2x2x1
jax: 0.10.0
libtpu: 0.0.40
codegen_flags: <defaults>
</compile_context>

<pallas_src>
import numpy as np
import jax
import jax.numpy as jnp
from jax import lax
from jax.experimental import pallas as pl
from jax.experimental.pallas import tpu as pltpu

BN_EPS = 1e-5
POOL_K = 7


# ----------------------------------------------------------------------------
# Pallas kernel: fused conv3x3/s2 (im2col, big-K) + BN(eval, folded) + AvgPool(7)
# ----------------------------------------------------------------------------
def _conv_bn_pool_kernel(xp_ref, w_ref, pool_ref, shift_ref, o_ref):
    """One grid step = `ips` images stacked along M.

    xp_ref:    (1, ips*Mp, Kp)       bf16  im2col LHS (9 taps packed into K)
    w_ref:     (Kp, Cout)            bf16  conv weights, BN scale folded, K zero-padded
    pool_ref:  (ips*ph*pw, ips*Mp)   bf16  block-diagonal 0 / (1/49) pooling matrix
    shift_ref: (1, Cout)             f32   folded bias/BN shift
    o_ref:     (1, ips*ph*pw, Cout)  f32   pooled output (lane-dense Cout=128)
    """
    # Single big-K MXU dot; accumulation lives in vregs / MRB, never in VMEM.
    acc = jnp.dot(xp_ref[0], w_ref[...], preferred_element_type=jnp.float32)
    # Fused AvgPool2d(7): tiny bf16 pooling matmul, then the folded BN/bias shift.
    pooled = jnp.dot(pool_ref[...], acc.astype(jnp.bfloat16),
                     preferred_element_type=jnp.float32)
    o_ref[...] = (pooled + shift_ref[...])[None]


# ----------------------------------------------------------------------------
# Plain-JAX glue: im2col planes, BN folding, pooling matrix
# ----------------------------------------------------------------------------
def _pool_matrix(oh, ow, m_pad, k):
    """(ph*pw, m_pad) matrix with 1/(k*k) over each pool window (floor mode)."""
    ph, pw = oh // k, ow // k
    base = np.zeros((ph * pw, m_pad), np.float32)
    for i in range(ph * k):
        for j in range(pw * k):
            base[(i // k) * pw + (j // k), i * ow + j] = 1.0 / (k * k)
    return base


def attention_forward(x_nchw, params, *, n_steps=None):
    """Eval-mode Attention.forward: conv+BN+avgpool, flattened (NCHW order)."""
    b, cin, h, w = x_nchw.shape
    assert h % 2 == 0 and w % 2 == 0, "expects even spatial dims"
    oh, ow = h // 2, w // 2
    assert oh >= POOL_K and ow >= POOL_K
    ph, pw = oh // POOL_K, ow // POOL_K
    cout = params["weight"].shape[0]

    if n_steps is None:
        # grid length 2 keeps both v7x TensorCores busy; on v5e/v6e (1 TC) a
        # single step (n_steps=1) minimizes per-step overhead instead.
        n_steps = min(b, 2)
    ips = -(-b // n_steps)                 # images stacked along M per grid step
    b_pad = n_steps * ips

    m = oh * ow
    m_pad = ((m + 7) // 8) * 8             # sublane-friendly row count per image
    k_pad = ((9 * cin + 127) // 128) * 128 # lane-dense contraction depth (64->640)

    # --- im2col LHS in bf16 (taps packed into K) ----------------------------
    x = jnp.transpose(x_nchw.astype(jnp.bfloat16), (0, 2, 3, 1))    # NHWC
    xpad = jnp.pad(x, ((0, 0), (1, 1), (1, 1), (0, 0)))             # (B,H+2,W+2,C)
    taps = [xpad[:, kh:kh + 2 * oh:2, kw:kw + 2 * ow:2, :]
            for kh in range(3) for kw in range(3)]                  # 9x (B,oh,ow,Cin)
    xcol = jnp.stack(taps, axis=3).reshape(b, m, 9 * cin)
    xcol = jnp.pad(xcol, ((0, b_pad - b), (0, m_pad - m), (0, k_pad - 9 * cin)))
    xcol = xcol.reshape(n_steps, ips * m_pad, k_pad)

    # --- fold eval-mode BN: scale into weights, bias/mean/beta into a shift --
    scale = params["gamma"] / jnp.sqrt(params["var"] + BN_EPS)
    w_mat = params["weight"] * scale[:, None, None, None]           # (Cout,Cin,3,3)
    w_mat = w_mat.transpose(2, 3, 1, 0).reshape(9 * cin, cout)      # tap-major K
    w_mat = jnp.pad(w_mat, ((0, k_pad - 9 * cin), (0, 0))).astype(jnp.bfloat16)
    shift = ((params["bias"] - params["mean"]) * scale + params["beta"])
    shift = shift.reshape(1, cout).astype(jnp.float32)

    # --- block-diagonal bf16 pooling matrix (floor mode, pad rows zeroed) ----
    base = _pool_matrix(oh, ow, m_pad, POOL_K)                      # (ph*pw, m_pad)
    pmat = jnp.asarray(np.kron(np.eye(ips, dtype=np.float32), base),
                       dtype=jnp.bfloat16)                          # (ips*ph*pw, ips*m_pad)

    out = pl.pallas_call(
        _conv_bn_pool_kernel,
        out_shape=jax.ShapeDtypeStruct((n_steps, ips * ph * pw, cout), jnp.float32),
        grid=(n_steps,),
        in_specs=[
            pl.BlockSpec((1, ips * m_pad, k_pad), lambda i: (i, 0, 0)),
            pl.BlockSpec((k_pad, cout), lambda i: (0, 0)),                 # resident
            pl.BlockSpec((ips * ph * pw, ips * m_pad), lambda i: (0, 0)),  # resident
            pl.BlockSpec((1, cout), lambda i: (0, 0)),                     # resident
        ],
        out_specs=pl.BlockSpec((1, ips * ph * pw, cout), lambda i: (i, 0, 0)),
        compiler_params=pltpu.CompilerParams(dimension_semantics=("parallel",)),
    )(xcol, w_mat, pmat, shift)

    out = out.reshape(b_pad, ph * pw, cout)[:b]                     # (B, ph*pw, Cout)
    # PyTorch flattens the NCHW (B, Cout, ph, pw) map.
    return jnp.transpose(out, (0, 2, 1)).reshape(b, -1)


# ----------------------------------------------------------------------------
# Deterministic parameter init (shapes from the module __init__)
# ----------------------------------------------------------------------------
def init_params(key, cin=64, cout=128):
    k0, k1, k2, k3, k4, k5 = jax.random.split(key, 6)
    s = 1.0 / np.sqrt(9 * cin)
    return dict(
        weight=jax.random.normal(k0, (cout, cin, 3, 3), jnp.float32) * s,
        bias=0.1 * jax.random.normal(k1, (cout,), jnp.float32),
        gamma=1.0 + 0.1 * jax.random.normal(k2, (cout,), jnp.float32),
        beta=0.1 * jax.random.normal(k3, (cout,), jnp.float32),
        mean=0.1 * jax.random.normal(k4, (cout,), jnp.float32),
        var=1.0 + 0.1 * jax.random.uniform(k5, (cout,), jnp.float32),
    )


# ----------------------------------------------------------------------------
# Pure-JAX reference (lax conv, NCHW, f32) for verification
# ----------------------------------------------------------------------------
def reference_forward(x, p):
    scale = p["gamma"] / jnp.sqrt(p["var"] + BN_EPS)
    y = lax.conv_general_dilated(
        x, p["weight"], window_strides=(2, 2), padding=((1, 1), (1, 1)),
        dimension_numbers=("NCHW", "OIHW", "NCHW"),
        precision=lax.Precision.HIGHEST)
    y = y + p["bias"][None, :, None, None]
    y = ((y - p["mean"][None, :, None, None]) * scale[None, :, None, None]
         + p["beta"][None, :, None, None])
    b, c, hh, ww = y.shape
    ph, pw = hh // POOL_K, ww // POOL_K
    y = y[:, :, :ph * POOL_K, :pw * POOL_K]
    y = y.reshape(b, c, ph, POOL_K, pw, POOL_K).mean(axis=(3, 5))
    return y.reshape(b, -1)


if __name__ == "__main__":
    key = jax.random.PRNGKey(0)
    kx, kp = jax.random.split(key)
    params = init_params(kp)

    # (B=2, C=64, H=28, W=28): conv -> (2,128,14,14), avgpool(7) -> (2,128,2,2).
    x = jax.random.normal(kx, (2, 64, 28, 28), jnp.float32)

    out = jax.jit(attention_forward)(x, params)
    out = jax.block_until_ready(out)

    ref = reference_forward(x, params)
    np.testing.assert_allclose(np.asarray(out), np.asarray(ref),
                               rtol=2e-2, atol=3e-2)
    assert out.shape == (2, 128 * 2 * 2)

    print("KERNEL_OK")
</pallas_src>

<mosaic_0001>
module attributes {stable_mosaic.version = 11 : i64} {
  func.func @_conv_bn_pool_kernel(%arg0: i32, %arg1: memref<1x200x640xbf16, #tpu.memory_space<vmem>>, %arg2: memref<640x128xbf16, #tpu.memory_space<vmem>>, %arg3: memref<4x200xbf16, #tpu.memory_space<vmem>>, %arg4: memref<1x128xf32, #tpu.memory_space<vmem>>, %arg5: memref<1x4x128xf32, #tpu.memory_space<vmem>>) attributes {dimension_semantics = [#tpu.dimension_semantics<parallel>], iteration_bounds = array<i64: 2>, scalar_prefetch = 0 : i64, scratch_operands = 0 : i64, tpu.core_type = #tpu.core_type<tc>, window_params = [{transform_indices = @transform_0, window_bounds = array<i64: 1, 200, 640>}, {pipeline_mode = #tpu.pipeline_mode<synchronous>, transform_indices = @transform_1, window_bounds = array<i64: 640, 128>}, {pipeline_mode = #tpu.pipeline_mode<synchronous>, transform_indices = @transform_2, window_bounds = array<i64: 4, 200>}, {pipeline_mode = #tpu.pipeline_mode<synchronous>, transform_indices = @transform_3, window_bounds = array<i64: 1, 128>}, {transform_indices = @transform_4, window_bounds = array<i64: 1, 4, 128>}]} {
    %c0 = arith.constant 0 : index
    %c0_0 = arith.constant 0 : index
    %c0_1 = arith.constant 0 : index
    %0 = vector.load %arg1[%c0, %c0_0, %c0_1] : memref<1x200x640xbf16, #tpu.memory_space<vmem>>, vector<1x200x640xbf16>
    %1 = vector.shape_cast %0 : vector<1x200x640xbf16> to vector<200x640xbf16>
    %c0_2 = arith.constant 0 : index
    %c0_3 = arith.constant 0 : index
    %2 = vector.load %arg2[%c0_2, %c0_3] : memref<640x128xbf16, #tpu.memory_space<vmem>>, vector<640x128xbf16>
    %cst = arith.constant dense<0.000000e+00> : vector<200x128xf32>
    %3 = tpu.matmul %1, %2, %cst {dimension_numbers = #tpu.dot_dimension_numbers<[1], [0], [0], [1], [0, 0, 1, 1], [], []>} : vector<200x640xbf16>, vector<640x128xbf16>, vector<200x128xf32> -> vector<200x128xf32>
    %c0_4 = arith.constant 0 : index
    %c0_5 = arith.constant 0 : index
    %4 = vector.load %arg3[%c0_4, %c0_5] : memref<4x200xbf16, #tpu.memory_space<vmem>>, vector<4x200xbf16>
    %5 = arith.truncf %3 : vector<200x128xf32> to vector<200x128xbf16>
    %cst_6 = arith.constant dense<0.000000e+00> : vector<4x128xf32>
    %6 = tpu.matmul %4, %5, %cst_6 {dimension_numbers = #tpu.dot_dimension_numbers<[1], [0], [0], [1], [0, 0, 1, 1], [], []>} : vector<4x200xbf16>, vector<200x128xbf16>, vector<4x128xf32> -> vector<4x128xf32>
    %c0_7 = arith.constant 0 : index
    %c0_8 = arith.constant 0 : index
    %7 = vector.load %arg4[%c0_7, %c0_8] : memref<1x128xf32, #tpu.memory_space<vmem>>, vector<1x128xf32>
    %8 = vector.broadcast %7 : vector<1x128xf32> to vector<4x128xf32>
    %9 = arith.addf %6, %8 : vector<4x128xf32>
    %10 = vector.shape_cast %9 : vector<4x128xf32> to vector<1x4x128xf32>
    %c0_9 = arith.constant 0 : index
    %c0_10 = arith.constant 0 : index
    %c0_11 = arith.constant 0 : index
    %11 = vector.load %arg5[%c0_9, %c0_10, %c0_11] : memref<1x4x128xf32, #tpu.memory_space<vmem>>, vector<1x4x128xf32>
    tpu.vector_store %arg5[%c0_9, %c0_10, %c0_11], %10 {strides = array<i32>} : memref<1x4x128xf32, #tpu.memory_space<vmem>>, vector<1x4x128xf32>,
    return
  }
  func.func @transform_0(%arg0: i32) -> (i32, i32, i32) {
    %c0_i32 = arith.constant 0 : i32
    %c0_i32_0 = arith.constant 0 : i32
    %c0_i32_1 = arith.constant 0 : i32
    return %arg0, %c0_i32, %c0_i32_0 : i32, i32, i32
  }
  func.func @transform_1(%arg0: i32) -> (i32, i32) {
    %c0_i32 = arith.constant 0 : i32
    %c0_i32_0 = arith.constant 0 : i32
    %c0_i32_1 = arith.constant 0 : i32
    return %c0_i32, %c0_i32_0 : i32, i32
  }
  func.func @transform_2(%arg0: i32) -> (i32, i32) {
    %c0_i32 = arith.constant 0 : i32
    %c0_i32_0 = arith.constant 0 : i32
    %c0_i32_1 = arith.constant 0 : i32
    return %c0_i32, %c0_i32_0 : i32, i32
  }
  func.func @transform_3(%arg0: i32) -> (i32, i32) {
    %c0_i32 = arith.constant 0 : i32
    %c0_i32_0 = arith.constant 0 : i32
    %c0_i32_1 = arith.constant 0 : i32
    return %c0_i32, %c0_i32_0 : i32, i32
  }
  func.func @transform_4(%arg0: i32) -> (i32, i32, i32) {
    %c0_i32 = arith.constant 0 : i32
    %c0_i32_0 = arith.constant 0 : i32
    %c0_i32_1 = arith.constant 0 : i32
    return %arg0, %c0_i32, %c0_i32_0 : i32, i32, i32
  }
}

</mosaic_0001>

<llo_original>
// kernel: attention_forward.1
$region0: #{attention_forward.1}
  #allocation0 [shape = 'u32[]', space=smem, size = 0x4, offset = 0x4, fixed_abs, tag = 'smem constant byte address 0x4 - core index']
  #allocation1 [shape = 'u32[144,128]{1,0:T(1,128)}', space=vmem, size = 0x12000, scoped, tag = 'internal scratch']
  %s0 = inlined_call_operand.vmem [shape: bf16[2,200,640], index: 0, kind: input, shape index: {}]
  %s1 = inlined_call_operand.vmem [shape: bf16[640,128], index: 1, kind: input, shape index: {}]
  %s2 = inlined_call_operand.vmem [shape: bf16[4,200], index: 2, kind: input, shape index: {}]
  %s3 = inlined_call_operand.vmem [shape: f32[1,128], index: 3, kind: input, shape index: {}]
  %s4 = inlined_call_operand.vmem [shape: f32[2,4,128], index: 4, kind: output, shape index: {}]
  %s5 = sld [smem:[#allocation0]]
  $region49: #{attention_forward.1} parent=0
    _
  %s7 = ssub.s32 1, %s5
  %s8 = scalar_select 0, %s7, %s5
  loop: start=0, step=1, limit=4
  $region2: #{attention_forward.1} parent=0 // loop_pre_header
    _
  $region3: #{attention_forward.1} parent=0 // loop_header
    %s10 = sphi 0, %s14
    %p11 = scmp.ge.s32.totalorder %s10, 4
    %s20 = sphi 0, %s22
    %s23 = sphi 0, %s20
    %s24 = sphi 0, %s23
    %s40 = sphi 0, %s24
    %s44 = sphi 0, %s44
    %s46 = sphi 0, %s44
    %s47 = sphi 0, %s46
    %s61 = sphi 0, %s47
    %s65 = sphi 0, %s65
    %s67 = sphi 0, %s65
    %s68 = sphi 0, %s67
    %s82 = sphi 0, %s68
    %s86 = sphi 0, %s86
    %s88 = sphi 0, %s86
    %s89 = sphi 0, %s88
    %s103 = sphi 0, %s89
    %s109 = sphi 0, %s111
    %s112 = sphi 0, %s109
    %s113 = sphi 0, %s112
    %s129 = sphi 0, %s113
  $region4: #{attention_forward.1} parent=0 // loop_header_branch
    %13 = sbr.rel (%p11) target = $region8
  $region5: #{attention_forward.1} parent=0 // loop_body
    %s15 = ssub.s32 %s10, 1
    %s16 = ssub.s32 %s10, 2
    %s17 = sadd.s32 %s10, 1
    %s18 = ssub.s32 %s10, %s17
    %p19 = scmp.eq.s32.totalorder %s18, 0
    %s21 = sadd.s32 %s20, 1
    %s22 = scalar_select %p19, %s20, %s21
    %p25 = pneg %p19
    %p26 = scmp.eq.s32.totalorder %s10, 1
    %p27 = por %p25, %p26
    %p28 = scmp.ne.s32.totalorder %s20, %s23
    %p29 = scmp.eq.s32.totalorder %s10, 0
    %p30 = por %p28, %p29
    %p31 = scmp.ne.s32.totalorder %s20, %s23
    %p32 = scmp.eq.s32.totalorder %s15, 1
    %p33 = por %p31, %p32
    %p34 = scmp.ne.s32.totalorder %s23, %s24
    %p35 = scmp.eq.s32.totalorder %s15, 0
    %p36 = por %p34, %p35
    %p37 = scmp.ne.s32.totalorder %s23, %s24
    %p38 = scmp.eq.s32.totalorder %s16, 1
    %p39 = por %p37, %p38
    %p41 = scmp.ne.s32.totalorder %s24, %s40
    %p42 = scmp.eq.s32.totalorder %s16, 0
    %p43 = por %p41, %p42
    %s45 = sadd.s32 %s44, 1
    %p48 = scmp.eq.s32.totalorder %s10, 1
    %p49 = scmp.ne.s32.totalorder %s44, %s46
    %p50 = scmp.eq.s32.totalorder %s10, 0
    %p51 = por %p49, %p50
    %p52 = scmp.ne.s32.totalorder %s44, %s46
    %p53 = scmp.eq.s32.totalorder %s15, 1
    %p54 = por %p52, %p53
    %p55 = scmp.ne.s32.totalorder %s46, %s47
    %p56 = scmp.eq.s32.totalorder %s15, 0
    %p57 = por %p55, %p56
    %p58 = scmp.ne.s32.totalorder %s46, %s47
    %p59 = scmp.eq.s32.totalorder %s16, 1
    %p60 = por %p58, %p59
    %p62 = scmp.ne.s32.totalorder %s47, %s61
    %p63 = scmp.eq.s32.totalorder %s16, 0
    %p64 = por %p62, %p63
    %s66 = sadd.s32 %s65, 1
    %p69 = scmp.eq.s32.totalorder %s10, 1
    %p70 = scmp.ne.s32.totalorder %s65, %s67
    %p71 = scmp.eq.s32.totalorder %s10, 0
    %p72 = por %p70, %p71
    %p73 = scmp.ne.s32.totalorder %s65, %s67
    %p74 = scmp.eq.s32.totalorder %s15, 1
    %p75 = por %p73, %p74
    %p76 = scmp.ne.s32.totalorder %s67, %s68
    %p77 = scmp.eq.s32.totalorder %s15, 0
    %p78 = por %p76, %p77
    %p79 = scmp.ne.s32.totalorder %s67, %s68
    %p80 = scmp.eq.s32.totalorder %s16, 1
    %p81 = por %p79, %p80
    %p83 = scmp.ne.s32.totalorder %s68, %s82
    %p84 = scmp.eq.s32.totalorder %s16, 0
    %p85 = por %p83, %p84
    %s87 = sadd.s32 %s86, 1
    %p90 = scmp.eq.s32.totalorder %s10, 1
    %p91 = scmp.ne.s32.totalorder %s86, %s88
    %p92 = scmp.eq.s32.totalorder %s10, 0
    %p93 = por %p91, %p92
    %p94 = scmp.ne.s32.totalorder %s86, %s88
    %p95 = scmp.eq.s32.totalorder %s15, 1
    %p96 = por %p94, %p95
    %p97 = scmp.ne.s32.totalorder %s88, %s89
    %p98 = scmp.eq.s32.totalorder %s15, 0
    %p99 = por %p97, %p98
    %p100 = scmp.ne.s32.totalorder %s88, %s89
    %p101 = scmp.eq.s32.totalorder %s16, 1
    %p102 = por %p100, %p101
    %p104 = scmp.ne.s32.totalorder %s89, %s103
    %p105 = scmp.eq.s32.totalorder %s16, 0
    %p106 = por %p104, %p105
    %s107 = ssub.s32 %s10, %s17
    %p108 = scmp.eq.s32.totalorder %s107, 0
    %s110 = sadd.s32 %s109, 1
    %s111 = scalar_select %p108, %s109, %s110
    %p114 = pneg %p108
    %p115 = scmp.eq.s32.totalorder %s10, 1
    %p116 = por %p114, %p115
    %p117 = scmp.ne.s32.totalorder %s109, %s112
    %p118 = scmp.eq.s32.totalorder %s10, 0
    %p119 = por %p117, %p118
    %p120 = scmp.ne.s32.totalorder %s109, %s112
    %p121 = scmp.eq.s32.totalorder %s15, 1
    %p122 = por %p120, %p121
    %p123 = scmp.ne.s32.totalorder %s112, %s113
    %p124 = scmp.eq.s32.totalorder %s15, 0
    %p125 = por %p123, %p124
    %p126 = scmp.ne.s32.totalorder %s112, %s113
    %p127 = scmp.eq.s32.totalorder %s16, 1
    %p128 = por %p126, %p127
    %p130 = scmp.ne.s32.totalorder %s113, %s129
    %p131 = scmp.eq.s32.totalorder %s16, 0
    %p132 = por %p130, %p131
    %p133 = scmp.le.s32.totalorder 1, %s10
    %p134 = scmp.lt.s32.totalorder %s10, 3
    %p135 = pnand %p133, %p134
    %p136 = pneg %p135
    // Predicated region
    $region9: #{attention_forward.1} parent=5 // pred_check
      _
    $region10: #{attention_forward.1} parent=5 // pred_check_branch
      %138 = sbr.rel (%p135) target = $region12
    $region11: #{attention_forward.1} parent=5 // pred_region
      %s139 = ssub.s32 %s10, 1
      // Predicated region
      $region13: #{attention_forward.1} parent=11 // pred_check
        %p140 = pneg %p57
      $region14: #{attention_forward.1} parent=11 // pred_check_branch
        %142 = sbr.rel (%p140) target = $region16
      $region15: #{attention_forward.1} parent=11 // pred_region
        _
      $region16: #{attention_forward.1} parent=11 // pred_fallthru
        _
      // Predicated region
      $region17: #{attention_forward.1} parent=11 // pred_check
        %p143 = pneg %p78
      $region18: #{attention_forward.1} parent=11 // pred_check_branch
        %145 = sbr.rel (%p143) target = $region20
      $region19: #{attention_forward.1} parent=11 // pred_region
        _
      $region20: #{attention_forward.1} parent=11 // pred_fallthru
        _
      // Predicated region
      $region21: #{attention_forward.1} parent=11 // pred_check
        %p146 = pneg %p99
      $region22: #{attention_forward.1} parent=11 // pred_check_branch
        %148 = sbr.rel (%p146) target = $region24
      $region23: #{attention_forward.1} parent=11 // pred_region
        _
      $region24: #{attention_forward.1} parent=11 // pred_fallthru
        _
    $region12: #{attention_forward.1} parent=5 // pred_fallthru
      _
    %p149 = scmp.lt.s32.totalorder %s10, 2
    // Predicated region
    $region25: #{attention_forward.1} parent=5 // pred_check
      %p150 = pneg %p149
    $region26: #{attention_forward.1} parent=5 // pred_check_branch
      %152 = sbr.rel (%p150) target = $region28
    $region27: #{attention_forward.1} parent=5 // pred_region
      // Predicated region
      $region29: #{attention_forward.1} parent=27 // pred_check
        %p153 = pneg %p30
      $region30: #{attention_forward.1} parent=27 // pred_check_branch
        %155 = sbr.rel (%p153) target = $region32
      $region31: #{attention_forward.1} parent=27 // pred_region
        %p156 = scmp.lt.s32.totalorder %s10, 1
        %s157 = scalar_select %p156, %s10, 1
        %s158 = smul.addr %s157, 125
        %s159 = smul.addr %s158, 4
        %s160 = scalar_lea.vmem %s0, %s159
      $region32: #{attention_forward.1} parent=27 // pred_fallthru
        _
    $region28: #{attention_forward.1} parent=5 // pred_fallthru
      _
    %p161 = scmp.le.s32.totalorder 1, %s10
    %p162 = scmp.lt.s32.totalorder %s10, 3
    %p163 = pnand %p161, %p162
    %p164 = pneg %p163
    // Predicated region
    $region33: #{attention_forward.1} parent=5 // pred_check
      _
    $region34: #{attention_forward.1} parent=5 // pred_check_branch
      %166 = sbr.rel (%p163) target = $region36
    $region35: #{attention_forward.1} parent=5 // pred_region
      %s167 = ssub.s32 %s10, 1
      %p168 = scmp.lt.s32.totalorder %s15, 1
      %s169 = scalar_select %p168, %s15, 1
      %s170 = smul.addr %s169, 125
      %s171 = smul.addr %s170, 4
      %s172 = scalar_lea.vmem %s0, %s171
      %p173 = pneg %p36
      %p174 = pneg %p33
      %p175 = pneg %p57
      %p176 = pneg %p54
      %p177 = pneg %p78
      %p178 = pneg %p75
      %p179 = pneg %p99
      %p180 = pneg %p96
      %p181 = pneg %p125
      %p182 = pneg %p122
      %p183 = scmp.lt.s32.totalorder %s15, 1
      %s184 = scalar_select %p183, %s15, 1
      %s185 = smul.addr %s184, 4
      %s186 = scalar_lea.vmem %s4, %s185
      %p187 = scmp.lt.s32.totalorder %s15, 1
      %s188 = scalar_select %p187, %s15, 1
      %s189 = smul.addr %s188, 125
      %s190 = smul.addr %s189, 4
      %s191 = scalar_lea.vmem %s0, %s190
      %p192 = scmp.lt.s32.totalorder %s15, 1
      %s193 = scalar_select %p192, %s15, 1
      %s194 = smul.addr %s193, 4
      %s195 = scalar_lea.vmem %s4, %s194
      %v197 = vld [vmem:[%s191] sm:$0xff]
      %v198 = vld [vmem:[%s191 + $0x8] sm:$0xff]
      %v199 = vld [vmem:[%s191 + $0x10] sm:$0xf]
      %v200 = vld [vmem:[%s191 + $0x14] sm:$0xff]
      %v201 = vld [vmem:[%s191 + $0x1c] sm:$0xff]
      %v202 = vld [vmem:[%s191 + $0x24] sm:$0xf]
      %v203 = vld [vmem:[%s191 + $0x28] sm:$0xff]
      %v204 = vld [vmem:[%s191 + $0x30] sm:$0xff]
      %v205 = vld [vmem:[%s191 + $0x38] sm:$0xf]
      %v206 = vld [vmem:[%s191 + $0x3c] sm:$0xff]
      %v207 = vld [vmem:[%s191 + $0x44] sm:$0xff]
      %v208 = vld [vmem:[%s191 + $0x4c] sm:$0xf]
      %v209 = vld [vmem:[%s191 + $0x50] sm:$0xff]
      %v210 = vld [vmem:[%s191 + $0x58] sm:$0xff]
      %v211 = vld [vmem:[%s191 + $0x60] sm:$0xf]
      %v212 = vld [vmem:[%s191 + $0x64] sm:$0xff]
      %v213 = vld [vmem:[%s191 + $0x6c] sm:$0xff]
      %v214 = vld [vmem:[%s191 + $0x74] sm:$0xf]
      %v215 = vld [vmem:[%s191 + $0x78] sm:$0xff]
      %v216 = vld [vmem:[%s191 + $0x80] sm:$0xff]
      %v217 = vld [vmem:[%s191 + $0x88] sm:$0xf]
      %v218 = vld [vmem:[%s191 + $0x8c] sm:$0xff]
      %v219 = vld [vmem:[%s191 + $0x94] sm:$0xff]
      %v220 = vld [vmem:[%s191 + $0x9c] sm:$0xf]
      %v221 = vld [vmem:[%s191 + $0xa0] sm:$0xff]
      %v222 = vld [vmem:[%s191 + $0xa8] sm:$0xff]
      %v223 = vld [vmem:[%s191 + $0xb0] sm:$0xf]
      %v224 = vld [vmem:[%s191 + $0xb4] sm:$0xff]
      %v225 = vld [vmem:[%s191 + $0xbc] sm:$0xff]
      %v226 = vld [vmem:[%s191 + $0xc4] sm:$0xf]
      %v227 = vld [vmem:[%s191 + $0xc8] sm:$0xff]
      %v228 = vld [vmem:[%s191 + $0xd0] sm:$0xff]
      %v229 = vld [vmem:[%s191 + $0xd8] sm:$0xf]
      %v230 = vld [vmem:[%s191 + $0xdc] sm:$0xff]
      %v231 = vld [vmem:[%s191 + $0xe4] sm:$0xff]
      %v232 = vld [vmem:[%s191 + $0xec] sm:$0xf]
      %v233 = vld [vmem:[%s191 + $0xf0] sm:$0xff]
      %v234 = vld [vmem:[%s191 + $0xf8] sm:$0xff]
      %v235 = vld [vmem:[%s191 + $0x100] sm:$0xf]
      %v236 = vld [vmem:[%s191 + $0x104] sm:$0xff]
      %v237 = vld [vmem:[%s191 + $0x10c] sm:$0xff]
      %v238 = vld [vmem:[%s191 + $0x114] sm:$0xf]
      %v239 = vld [vmem:[%s191 + $0x118] sm:$0xff]
      %v240 = vld [vmem:[%s191 + $0x120] sm:$0xff]
      %v241 = vld [vmem:[%s191 + $0x128] sm:$0xf]
      %v242 = vld [vmem:[%s191 + $0x12c] sm:$0xff]
      %v243 = vld [vmem:[%s191 + $0x134] sm:$0xff]
      %v244 = vld [vmem:[%s191 + $0x13c] sm:$0xf]
      %v245 = vld [vmem:[%s191 + $0x140] sm:$0xff]
      %v246 = vld [vmem:[%s191 + $0x148] sm:$0xff]
      %v247 = vld [vmem:[%s191 + $0x150] sm:$0xf]
      %v248 = vld [vmem:[%s191 + $0x154] sm:$0xff]
      %v249 = vld [vmem:[%s191 + $0x15c] sm:$0xff]
      %v250 = vld [vmem:[%s191 + $0x164] sm:$0xf]
      %v251 = vld [vmem:[%s191 + $0x168] sm:$0xff]
      %v252 = vld [vmem:[%s191 + $0x170] sm:$0xff]
      %v253 = vld [vmem:[%s191 + $0x178] sm:$0xf]
      %v254 = vld [vmem:[%s191 + $0x17c] sm:$0xff]
      %v255 = vld [vmem:[%s191 + $0x184] sm:$0xff]
      %v256 = vld [vmem:[%s191 + $0x18c] sm:$0xf]
      %v257 = vld [vmem:[%s191 + $0x190] sm:$0xff]
      %v258 = vld [vmem:[%s191 + $0x198] sm:$0xff]
      %v259 = vld [vmem:[%s191 + $0x1a0] sm:$0xf]
      %v260 = vld [vmem:[%s191 + $0x1a4] sm:$0xff]
      %v261 = vld [vmem:[%s191 + $0x1ac] sm:$0xff]
      %v262 = vld [vmem:[%s191 + $0x1b4] sm:$0xf]
      %v263 = vld [vmem:[%s191 + $0x1b8] sm:$0xff]
      %v264 = vld [vmem:[%s191 + $0x1c0] sm:$0xff]
      %v265 = vld [vmem:[%s191 + $0x1c8] sm:$0xf]
      %v266 = vld [vmem:[%s191 + $0x1cc] sm:$0xff]
      %v267 = vld [vmem:[%s191 + $0x1d4] sm:$0xff]
      %v268 = vld [vmem:[%s191 + $0x1dc] sm:$0xf]
      %v269 = vld [vmem:[%s191 + $0x1e0] sm:$0xff]
      %v270 = vld [vmem:[%s191 + $0x1e8] sm:$0xff]
      %v271 = vld [vmem:[%s191 + $0x1f0] sm:$0xf]
      %v272 = vld [vmem:[%s1] sm:$0xf]
      %v273 = vld [vmem:[%s1 + $0x4] sm:$0xf]
      %v274 = vld [vmem:[%s1 + $0x8] sm:$0xf]
      %v275 = vld [vmem:[%s1 + $0xc] sm:$0xf]
      %v276 = vld [vmem:[%s1 + $0x10] sm:$0xf]
      %v277 = vld [vmem:[%s1 + $0x14] sm:$0xf]
      %v278 = vld [vmem:[%s1 + $0x18] sm:$0xf]
      %v279 = vld [vmem:[%s1 + $0x1c] sm:$0xf]
      %v280 = vld [vmem:[%s1 + $0x20] sm:$0xf]
      %v281 = vld [vmem:[%s1 + $0x24] sm:$0xf]
      %v282 = vld [vmem:[%s1 + $0x28] sm:$0xf]
      %v283 = vld [vmem:[%s1 + $0x2c] sm:$0xf]
      %v284 = vld [vmem:[%s1 + $0x30] sm:$0xf]
      %v285 = vld [vmem:[%s1 + $0x34] sm:$0xf]
      %v286 = vld [vmem:[%s1 + $0x38] sm:$0xf]
      %v287 = vld [vmem:[%s1 + $0x3c] sm:$0xf]
      %v288 = vld [vmem:[%s1 + $0x40] sm:$0xf]
      %v289 = vld [vmem:[%s1 + $0x44] sm:$0xf]
      %v290 = vld [vmem:[%s1 + $0x48] sm:$0xf]
      %v291 = vld [vmem:[%s1 + $0x4c] sm:$0xf]
      %v292 = vld [vmem:[%s1 + $0x50] sm:$0xf]
      %v293 = vld [vmem:[%s1 + $0x54] sm:$0xf]
      %v294 = vld [vmem:[%s1 + $0x58] sm:$0xf]
      %v295 = vld [vmem:[%s1 + $0x5c] sm:$0xf]
      %v296 = vld [vmem:[%s1 + $0x60] sm:$0xf]
      %v297 = vld [vmem:[%s1 + $0x64] sm:$0xf]
      %v298 = vld [vmem:[%s1 + $0x68] sm:$0xf]
      %v299 = vld [vmem:[%s1 + $0x6c] sm:$0xf]
      %v300 = vld [vmem:[%s1 + $0x70] sm:$0xf]
      %v301 = vld [vmem:[%s1 + $0x74] sm:$0xf]
      %v302 = vld [vmem:[%s1 + $0x78] sm:$0xf]
      %v303 = vld [vmem:[%s1 + $0x7c] sm:$0xf]
      %v304 = vld [vmem:[%s1 + $0x80] sm:$0xf]
      %v305 = vld [vmem:[%s1 + $0x84] sm:$0xf]
      %v306 = vld [vmem:[%s1 + $0x88] sm:$0xf]
      %v307 = vld [vmem:[%s1 + $0x8c] sm:$0xf]
      %v308 = vld [vmem:[%s1 + $0x90] sm:$0xf]
      %v309 = vld [vmem:[%s1 + $0x94] sm:$0xf]
      %v310 = vld [vmem:[%s1 + $0x98] sm:$0xf]
      %v311 = vld [vmem:[%s1 + $0x9c] sm:$0xf]
      %v312 = vld [vmem:[%s1 + $0xa0] sm:$0xf]
      %v313 = vld [vmem:[%s1 + $0xa4] sm:$0xf]
      %v314 = vld [vmem:[%s1 + $0xa8] sm:$0xf]
      %v315 = vld [vmem:[%s1 + $0xac] sm:$0xf]
      %v316 = vld [vmem:[%s1 + $0xb0] sm:$0xf]
      %v317 = vld [vmem:[%s1 + $0xb4] sm:$0xf]
      %v318 = vld [vmem:[%s1 + $0xb8] sm:$0xf]
      %v319 = vld [vmem:[%s1 + $0xbc] sm:$0xf]
      %v320 = vld [vmem:[%s1 + $0xc0] sm:$0xf]
      %v321 = vld [vmem:[%s1 + $0xc4] sm:$0xf]
      %v322 = vld [vmem:[%s1 + $0xc8] sm:$0xf]
      %v323 = vld [vmem:[%s1 + $0xcc] sm:$0xf]
      %v324 = vld [vmem:[%s1 + $0xd0] sm:$0xf]
      %v325 = vld [vmem:[%s1 + $0xd4] sm:$0xf]
      %v326 = vld [vmem:[%s1 + $0xd8] sm:$0xf]
      %v327 = vld [vmem:[%s1 + $0xdc] sm:$0xf]
      %v328 = vld [vmem:[%s1 + $0xe0] sm:$0xf]
      %v329 = vld [vmem:[%s1 + $0xe4] sm:$0xf]
      %v330 = vld [vmem:[%s1 + $0xe8] sm:$0xf]
      %v331 = vld [vmem:[%s1 + $0xec] sm:$0xf]
      %v332 = vld [vmem:[%s1 + $0xf0] sm:$0xf]
      %v333 = vld [vmem:[%s1 + $0xf4] sm:$0xf]
      %v334 = vld [vmem:[%s1 + $0xf8] sm:$0xf]
      %v335 = vld [vmem:[%s1 + $0xfc] sm:$0xf]
      %v336 = vld [vmem:[%s1 + $0x100] sm:$0xf]
      %v337 = vld [vmem:[%s1 + $0x104] sm:$0xf]
      %v338 = vld [vmem:[%s1 + $0x108] sm:$0xf]
      %v339 = vld [vmem:[%s1 + $0x10c] sm:$0xf]
      %v340 = vld [vmem:[%s1 + $0x110] sm:$0xf]
      %v341 = vld [vmem:[%s1 + $0x114] sm:$0xf]
      %v342 = vld [vmem:[%s1 + $0x118] sm:$0xf]
      %v343 = vld [vmem:[%s1 + $0x11c] sm:$0xf]
      %v344 = vld [vmem:[%s1 + $0x120] sm:$0xf]
      %v345 = vld [vmem:[%s1 + $0x124] sm:$0xf]
      %v346 = vld [vmem:[%s1 + $0x128] sm:$0xf]
      %v347 = vld [vmem:[%s1 + $0x12c] sm:$0xf]
      %v348 = vld [vmem:[%s1 + $0x130] sm:$0xf]
      %v349 = vld [vmem:[%s1 + $0x134] sm:$0xf]
      %v350 = vld [vmem:[%s1 + $0x138] sm:$0xf]
      %v351 = vld [vmem:[%s1 + $0x13c] sm:$0xf]
      %v427 = vunpack.c.l.b16 %v197
      %v428 = vunpack.c.h.b16 %v197
      %v429 = vunpack.c.l.b16 %v198
      %v430 = vunpack.c.h.b16 %v198
      %v431 = vunpack.c.l.b16 %v199
      %v432 = vunpack.c.l.b16 %v200
      %v433 = vunpack.c.h.b16 %v200
      %v434 = vunpack.c.l.b16 %v201
      %v435 = vunpack.c.h.b16 %v201
      %v436 = vunpack.c.l.b16 %v202
      %v437 = vunpack.c.l.b16 %v203
      %v438 = vunpack.c.h.b16 %v203
      %v439 = vunpack.c.l.b16 %v204
      %v440 = vunpack.c.h.b16 %v204
      %v441 = vunpack.c.l.b16 %v205
      %v442 = vunpack.c.l.b16 %v206
      %v443 = vunpack.c.h.b16 %v206
      %v444 = vunpack.c.l.b16 %v207
      %v445 = vunpack.c.h.b16 %v207
      %v446 = vunpack.c.l.b16 %v208
      %v447 = vunpack.c.l.b16 %v209
      %v448 = vunpack.c.h.b16 %v209
      %v449 = vunpack.c.l.b16 %v210
      %v450 = vunpack.c.h.b16 %v210
      %v451 = vunpack.c.l.b16 %v211
      %v452 = vunpack.c.l.b16 %v212
      %v453 = vunpack.c.h.b16 %v212
      %v454 = vunpack.c.l.b16 %v213
      %v455 = vunpack.c.h.b16 %v213
      %v456 = vunpack.c.l.b16 %v214
      %v457 = vunpack.c.l.b16 %v215
      %v458 = vunpack.c.h.b16 %v215
      %v459 = vunpack.c.l.b16 %v216
      %v460 = vunpack.c.h.b16 %v216
      %v461 = vunpack.c.l.b16 %v217
      %v462 = vunpack.c.l.b16 %v218
      %v463 = vunpack.c.h.b16 %v218
      %v464 = vunpack.c.l.b16 %v219
      %v465 = vunpack.c.h.b16 %v219
      %v466 = vunpack.c.l.b16 %v220
      %v467 = vunpack.c.l.b16 %v221
      %v468 = vunpack.c.h.b16 %v221
      %v469 = vunpack.c.l.b16 %v222
      %v470 = vunpack.c.h.b16 %v222
      %v471 = vunpack.c.l.b16 %v223
      %v472 = vunpack.c.l.b16 %v224
      %v473 = vunpack.c.h.b16 %v224
      %v474 = vunpack.c.l.b16 %v225
      %v475 = vunpack.c.h.b16 %v225
      %v476 = vunpack.c.l.b16 %v226
      %v477 = vunpack.c.l.b16 %v227
      %v478 = vunpack.c.h.b16 %v227
      %v479 = vunpack.c.l.b16 %v228
      %v480 = vunpack.c.h.b16 %v228
      %v481 = vunpack.c.l.b16 %v229
      %v482 = vunpack.c.l.b16 %v230
      %v483 = vunpack.c.h.b16 %v230
      %v484 = vunpack.c.l.b16 %v231
      %v485 = vunpack.c.h.b16 %v231
      %v486 = vunpack.c.l.b16 %v232
      %v487 = vunpack.c.l.b16 %v233
      %v488 = vunpack.c.h.b16 %v233
      %v489 = vunpack.c.l.b16 %v234
      %v490 = vunpack.c.h.b16 %v234
      %v491 = vunpack.c.l.b16 %v235
      %v492 = vunpack.c.l.b16 %v236
      %v493 = vunpack.c.h.b16 %v236
      %v494 = vunpack.c.l.b16 %v237
      %v495 = vunpack.c.h.b16 %v237
      %v496 = vunpack.c.l.b16 %v238
      %v497 = vunpack.c.l.b16 %v239
      %v498 = vunpack.c.h.b16 %v239
      %v499 = vunpack.c.l.b16 %v240
      %v500 = vunpack.c.h.b16 %v240
      %v501 = vunpack.c.l.b16 %v241
      %v502 = vunpack.c.l.b16 %v242
      %v503 = vunpack.c.h.b16 %v242
      %v504 = vunpack.c.l.b16 %v243
      %v505 = vunpack.c.h.b16 %v243
      %v506 = vunpack.c.l.b16 %v244
      %v507 = vunpack.c.l.b16 %v245
      %v508 = vunpack.c.h.b16 %v245
      %v509 = vunpack.c.l.b16 %v246
      %v510 = vunpack.c.h.b16 %v246
      %v511 = vunpack.c.l.b16 %v247
      %v512 = vunpack.c.l.b16 %v248
      %v513 = vunpack.c.h.b16 %v248
      %v514 = vunpack.c.l.b16 %v249
      %v515 = vunpack.c.h.b16 %v249
      %v516 = vunpack.c.l.b16 %v250
      %v517 = vunpack.c.l.b16 %v251
      %v518 = vunpack.c.h.b16 %v251
      %v519 = vunpack.c.l.b16 %v252
      %v520 = vunpack.c.h.b16 %v252
      %v521 = vunpack.c.l.b16 %v253
      %v522 = vunpack.c.l.b16 %v254
      %v523 = vunpack.c.h.b16 %v254
      %v524 = vunpack.c.l.b16 %v255
      %v525 = vunpack.c.h.b16 %v255
      %v526 = vunpack.c.l.b16 %v256
      %v527 = vunpack.c.l.b16 %v257
      %v528 = vunpack.c.h.b16 %v257
      %v529 = vunpack.c.l.b16 %v258
      %v530 = vunpack.c.h.b16 %v258
      %v531 = vunpack.c.l.b16 %v259
      %v532 = vunpack.c.l.b16 %v260
      %v533 = vunpack.c.h.b16 %v260
      %v534 = vunpack.c.l.b16 %v261
      %v535 = vunpack.c.h.b16 %v261
      %v536 = vunpack.c.l.b16 %v262
      %v537 = vunpack.c.l.b16 %v263
      %v538 = vunpack.c.h.b16 %v263
      %v539 = vunpack.c.l.b16 %v264
      %v540 = vunpack.c.h.b16 %v264
      %v541 = vunpack.c.l.b16 %v265
      %v542 = vunpack.c.l.b16 %v266
      %v543 = vunpack.c.h.b16 %v266
      %v544 = vunpack.c.l.b16 %v267
      %v545 = vunpack.c.h.b16 %v267
      %v546 = vunpack.c.l.b16 %v268
      %v547 = vunpack.c.l.b16 %v269
      %v548 = vunpack.c.h.b16 %v269
      %v549 = vunpack.c.l.b16 %v270
      %v550 = vunpack.c.h.b16 %v270
      %v551 = vunpack.c.l.b16 %v271
      %v552 = vpack.c.b16 %v432, %v427
      %v553 = vpack.c.b16 %v433, %v428
      %v554 = vpack.c.b16 %v434, %v429
      %v555 = vpack.c.b16 %v435, %v430
      %v556 = vpack.c.b16 %v436, %v431
      %v557 = vpack.c.b16 %v442, %v437
      %v558 = vpack.c.b16 %v443, %v438
      %v559 = vpack.c.b16 %v444, %v439
      %v560 = vpack.c.b16 %v445, %v440
      %v561 = vpack.c.b16 %v446, %v441
      %v562 = vpack.c.b16 %v452, %v447
      %v563 = vpack.c.b16 %v453, %v448
      %v564 = vpack.c.b16 %v454, %v449
      %v565 = vpack.c.b16 %v455, %v450
      %v566 = vpack.c.b16 %v456, %v451
      %v567 = vpack.c.b16 %v462, %v457
      %v568 = vpack.c.b16 %v463, %v458
      %v569 = vpack.c.b16 %v464, %v459
      %v570 = vpack.c.b16 %v465, %v460
      %v571 = vpack.c.b16 %v466, %v461
      %v572 = vpack.c.b16 %v472, %v467
      %v573 = vpack.c.b16 %v473, %v468
      %v574 = vpack.c.b16 %v474, %v469
      %v575 = vpack.c.b16 %v475, %v470
      %v576 = vpack.c.b16 %v476, %v471
      %v577 = vpack.c.b16 %v482, %v477
      %v578 = vpack.c.b16 %v483, %v478
      %v579 = vpack.c.b16 %v484, %v479
      %v580 = vpack.c.b16 %v485, %v480
      %v581 = vpack.c.b16 %v486, %v481
      %v582 = vpack.c.b16 %v492, %v487
      %v583 = vpack.c.b16 %v493, %v488
      %v584 = vpack.c.b16 %v494, %v489
      %v585 = vpack.c.b16 %v495, %v490
      %v586 = vpack.c.b16 %v496, %v491
      %v587 = vpack.c.b16 %v502, %v497
      %v588 = vpack.c.b16 %v503, %v498
      %v589 = vpack.c.b16 %v504, %v499
      %v590 = vpack.c.b16 %v505, %v500
      %v591 = vpack.c.b16 %v506, %v501
      %v592 = vpack.c.b16 %v512, %v507
      %v593 = vpack.c.b16 %v513, %v508
      %v594 = vpack.c.b16 %v514, %v509
      %v595 = vpack.c.b16 %v515, %v510
      %v596 = vpack.c.b16 %v516, %v511
      %v597 = vpack.c.b16 %v522, %v517
      %v598 = vpack.c.b16 %v523, %v518
      %v599 = vpack.c.b16 %v524, %v519
      %v600 = vpack.c.b16 %v525, %v520
      %v601 = vpack.c.b16 %v526, %v521
      %v602 = vpack.c.b16 %v532, %v527
      %v603 = vpack.c.b16 %v533, %v528
      %v604 = vpack.c.b16 %v534, %v529
      %v605 = vpack.c.b16 %v535, %v530
      %v606 = vpack.c.b16 %v536, %v531
      %v607 = vpack.c.b16 %v542, %v537
      %v608 = vpack.c.b16 %v543, %v538
      %v609 = vpack.c.b16 %v544, %v539
      %v610 = vpack.c.b16 %v545, %v540
      %v611 = vpack.c.b16 %v546, %v541
      %v612 = vpack.c.b16 %v547, %v547
      %v613 = vpack.c.b16 %v548, %v548
      %v614 = vpack.c.b16 %v549, %v549
      %v615 = vpack.c.b16 %v550, %v550
      %v616 = vpack.c.b16 %v551, %v551
      %v762 = vunpack.c.l.b16 %v272
      %v763 = vunpack.c.l.b16 %v273
      %v764 = vunpack.c.l.b16 %v274
      %v765 = vunpack.c.l.b16 %v275
      %v766 = vunpack.c.l.b16 %v276
      %v767 = vunpack.c.l.b16 %v277
      %v768 = vunpack.c.l.b16 %v278
      %v769 = vunpack.c.l.b16 %v279
      %v770 = vunpack.c.l.b16 %v280
      %v771 = vunpack.c.l.b16 %v281
      %v772 = vunpack.c.l.b16 %v282
      %v773 = vunpack.c.l.b16 %v283
      %v774 = vunpack.c.l.b16 %v284
      %v775 = vunpack.c.l.b16 %v285
      %v776 = vunpack.c.l.b16 %v286
      %v777 = vunpack.c.l.b16 %v287
      %v778 = vunpack.c.l.b16 %v288
      %v779 = vunpack.c.l.b16 %v289
      %v780 = vunpack.c.l.b16 %v290
      %v781 = vunpack.c.l.b16 %v291
      %v782 = vunpack.c.l.b16 %v292
      %v783 = vunpack.c.l.b16 %v293
      %v784 = vunpack.c.l.b16 %v294
      %v785 = vunpack.c.l.b16 %v295
      %v786 = vunpack.c.l.b16 %v296
      %v787 = vunpack.c.l.b16 %v297
      %v788 = vunpack.c.l.b16 %v298
      %v789 = vunpack.c.l.b16 %v299
      %v790 = vunpack.c.l.b16 %v300
      %v791 = vunpack.c.l.b16 %v301
      %v792 = vunpack.c.l.b16 %v302
      %v793 = vunpack.c.l.b16 %v303
      %v794 = vunpack.c.l.b16 %v304
      %v795 = vunpack.c.l.b16 %v305
      %v796 = vunpack.c.l.b16 %v306
      %v797 = vunpack.c.l.b16 %v307
      %v798 = vunpack.c.l.b16 %v308
      %v799 = vunpack.c.l.b16 %v309
      %v800 = vunpack.c.l.b16 %v310
      %v801 = vunpack.c.l.b16 %v311
      %v802 = vunpack.c.l.b16 %v312
      %v803 = vunpack.c.l.b16 %v313
      %v804 = vunpack.c.l.b16 %v314
      %v805 = vunpack.c.l.b16 %v315
      %v806 = vunpack.c.l.b16 %v316
      %v807 = vunpack.c.l.b16 %v317
      %v808 = vunpack.c.l.b16 %v318
      %v809 = vunpack.c.l.b16 %v319
      %v810 = vunpack.c.l.b16 %v320
      %v811 = vunpack.c.l.b16 %v321
      %v812 = vunpack.c.l.b16 %v322
      %v813 = vunpack.c.l.b16 %v323
      %v814 = vunpack.c.l.b16 %v324
      %v815 = vunpack.c.l.b16 %v325
      %v816 = vunpack.c.l.b16 %v326
      %v817 = vunpack.c.l.b16 %v327
      %v818 = vunpack.c.l.b16 %v328
      %v819 = vunpack.c.l.b16 %v329
      %v820 = vunpack.c.l.b16 %v330
      %v821 = vunpack.c.l.b16 %v331
      %v822 = vunpack.c.l.b16 %v332
      %v823 = vunpack.c.l.b16 %v333
      %v824 = vunpack.c.l.b16 %v334
      %v825 = vunpack.c.l.b16 %v335
      %v826 = vunpack.c.l.b16 %v336
      %v827 = vunpack.c.l.b16 %v337
      %v828 = vunpack.c.l.b16 %v338
      %v829 = vunpack.c.l.b16 %v339
      %v830 = vunpack.c.l.b16 %v340
      %v831 = vunpack.c.l.b16 %v341
      %v832 = vunpack.c.l.b16 %v342
      %v833 = vunpack.c.l.b16 %v343
      %v834 = vunpack.c.l.b16 %v344
      %v835 = vunpack.c.l.b16 %v345
      %v836 = vunpack.c.l.b16 %v346
      %v837 = vunpack.c.l.b16 %v347
      %v838 = vunpack.c.l.b16 %v348
      %v839 = vunpack.c.l.b16 %v349
      %v840 = vunpack.c.l.b16 %v350
      %v841 = vunpack.c.l.b16 %v351
      %v842 = vpack.c.b16 %v763, %v762
      %v843 = vpack.c.b16 %v765, %v764
      %v844 = vpack.c.b16 %v767, %v766
      %v845 = vpack.c.b16 %v769, %v768
      %v846 = vpack.c.b16 %v771, %v770
      %v847 = vpack.c.b16 %v773, %v772
      %v848 = vpack.c.b16 %v775, %v774
      %v849 = vpack.c.b16 %v777, %v776
      %v850 = vpack.c.b16 %v779, %v778
      %v851 = vpack.c.b16 %v781, %v780
      %v852 = vpack.c.b16 %v783, %v782
      %v853 = vpack.c.b16 %v785, %v784
      %v854 = vpack.c.b16 %v787, %v786
      %v855 = vpack.c.b16 %v789, %v788
      %v856 = vpack.c.b16 %v791, %v790
      %v857 = vpack.c.b16 %v793, %v792
      %v858 = vpack.c.b16 %v795, %v794
      %v859 = vpack.c.b16 %v797, %v796
      %v860 = vpack.c.b16 %v799, %v798
      %v861 = vpack.c.b16 %v801, %v800
      %v862 = vpack.c.b16 %v803, %v802
      %v863 = vpack.c.b16 %v805, %v804
      %v864 = vpack.c.b16 %v807, %v806
      %v865 = vpack.c.b16 %v809, %v808
      %v866 = vpack.c.b16 %v811, %v810
      %v867 = vpack.c.b16 %v813, %v812
      %v868 = vpack.c.b16 %v815, %v814
      %v869 = vpack.c.b16 %v817, %v816
      %v870 = vpack.c.b16 %v819, %v818
      %v871 = vpack.c.b16 %v821, %v820
      %v872 = vpack.c.b16 %v823, %v822
      %v873 = vpack.c.b16 %v825, %v824
      %v874 = vpack.c.b16 %v827, %v826
      %v875 = vpack.c.b16 %v829, %v828
      %v876 = vpack.c.b16 %v831, %v830
      %v877 = vpack.c.b16 %v833, %v832
      %v878 = vpack.c.b16 %v835, %v834
      %v879 = vpack.c.b16 %v837, %v836
      %v880 = vpack.c.b16 %v839, %v838
      %v881 = vpack.c.b16 %v841, %v840
      %922 = vmatprep.subr.bf16.mxu0 0
      %923 = vmatpush1.bf16.msra.mxu0 %v842
      %924 = vmatprep.subr.bf16.mxu0 0
      %925 = vmatpush1.bf16.msra.mxu0 %v843
      %926 = vmatprep.subr.bf16.mxu0 0
      %927 = vmatpush1.bf16.msra.mxu0 %v844
      %928 = vmatprep.subr.bf16.mxu0 0
      %929 = vmatpush1.bf16.msra.mxu0 %v845
      %930 = vmatprep.subr.bf16.mxu0 0
      %931 = vmatpush1.bf16.msra.mxu0 %v846
      %932 = vmatprep.subr.bf16.mxu0 0
      %933 = vmatpush1.bf16.msra.mxu0 %v847
      %934 = vmatprep.subr.bf16.mxu0 0
      %935 = vmatpush1.bf16.msra.mxu0 %v848
      %936 = vmatprep.subr.bf16.mxu0 0
      %937 = vmatpush1.bf16.msra.mxu0 %v849
      %938 = vmatprep.subr.bf16.mxu0 0
      %939 = vmatpush1.bf16.msra.mxu0 %v850
      %940 = vmatprep.subr.bf16.mxu0 0
      %941 = vmatpush1.bf16.msra.mxu0 %v851
      %942 = vmatprep.subr.bf16.mxu0 0
      %943 = vmatpush1.bf16.msra.mxu0 %v852
      %944 = vmatprep.subr.bf16.mxu0 0
      %945 = vmatpush1.bf16.msra.mxu0 %v853
      %946 = vmatprep.subr.bf16.mxu0 0
      %947 = vmatpush1.bf16.msra.mxu0 %v854
      %948 = vmatprep.subr.bf16.mxu0 0
      %949 = vmatpush1.bf16.msra.mxu0 %v855
      %950 = vmatprep.subr.bf16.mxu0 0
      %951 = vmatpush1.bf16.msra.mxu0 %v856
      %952 = vmatprep.subr.bf16.mxu0 0
      %953 = vmatpush1.bf16.msra.mxu0 %v857
      %954 = vmatprep.mubr.bf16.mxu0 %v553
      %955 = vmatmul.mubr.bf16.gmra.mrb[0].mxu0 %v552
      %v956 = vpop.f32.mrb[0].mxu0
      %v957 = vadd.f32 0.0, %v956
      %v958 = vpop.f32.mrb[0].mxu0
      %v959 = vpop.f32.mrb[0].mxu0
      %v960 = vadd.f32 0.0, %v959
      %v961 = vpop.f32.mrb[0].mxu0
      %962 = vmatprep.mubr.bf16.mxu0 %v558
      %963 = vmatmul.mubr.bf16.gmra.mrb[0].mxu0 %v557
      %v964 = vpop.f32.mrb[0].mxu0
      %v965 = vadd.f32 0.0, %v964
      %v966 = vpop.f32.mrb[0].mxu0
      %v967 = vpop.f32.mrb[0].mxu0
      %v968 = vadd.f32 0.0, %v967
      %v969 = vpop.f32.mrb[0].mxu0
      %970 = vmatprep.mubr.bf16.mxu0 %v563
      %971 = vmatmul.mubr.bf16.gmra.mrb[0].mxu0 %v562
      %v972 = vpop.f32.mrb[0].mxu0
      %v973 = vadd.f32 0.0, %v972
      %v974 = vpop.f32.mrb[0].mxu0
      %v975 = vpop.f32.mrb[0].mxu0
      %v976 = vadd.f32 0.0, %v975
      %v977 = vpop.f32.mrb[0].mxu0
      %978 = vmatprep.mubr.bf16.mxu0 %v568
      %979 = vmatmul.mubr.bf16.gmra.mrb[0].mxu0 %v567
      %v980 = vpop.f32.mrb[0].mxu0
      %v981 = vadd.f32 0.0, %v980
      %v982 = vpop.f32.mrb[0].mxu0
      %v983 = vpop.f32.mrb[0].mxu0
      %v984 = vadd.f32 0.0, %v983
      %v985 = vpop.f32.mrb[0].mxu0
      %986 = vmatprep.mubr.bf16.mxu0 %v573
      %987 = vmatmul.mubr.bf16.gmra.mrb[0].mxu0 %v572
      %v988 = vpop.f32.mrb[0].mxu0
      %v989 = vadd.f32 0.0, %v988
      %v990 = vpop.f32.mrb[0].mxu0
      %v991 = vpop.f32.mrb[0].mxu0
      %v992 = vadd.f32 0.0, %v991
      %v993 = vpop.f32.mrb[0].mxu0
      %994 = vmatprep.mubr.bf16.mxu0 %v578
      %995 = vmatmul.mubr.bf16.gmra.mrb[0].mxu0 %v577
      %v996 = vpop.f32.mrb[0].mxu0
      %v997 = vadd.f32 0.0, %v996
      %v998 = vpop.f32.mrb[0].mxu0
      %v999 = vpop.f32.mrb[0].mxu0
      %v1000 = vadd.f32 0.0, %v999
      %v1001 = vpop.f32.mrb[0].mxu0
      %1002 = vmatprep.mubr.bf16.mxu0 %v583
      %1003 = vmatmul.mubr.bf16.gmra.mrb[0].mxu0 %v582
      %v1004 = vpop.f32.mrb[0].mxu0
      %v1005 = vadd.f32 0.0, %v1004
      %v1006 = vpop.f32.mrb[0].mxu0
      %v1007 = vpop.f32.mrb[0].mxu0
      %v1008 = vadd.f32 0.0, %v1007
      %v1009 = vpop.f32.mrb[0].mxu0
      %1010 = vmatprep.mubr.bf16.mxu0 %v588
      %1011 = vmatmul.mubr.bf16.gmra.mrb[0].mxu0 %v587
      %v1012 = vpop.f32.mrb[0].mxu0
      %v1013 = vadd.f32 0.0, %v1012
      %v1014 = vpop.f32.mrb[0].mxu0
      %v1015 = vpop.f32.mrb[0].mxu0
      %v1016 = vadd.f32 0.0, %v1015
      %v1017 = vpop.f32.mrb[0].mxu0
      %1018 = vmatprep.mubr.bf16.mxu0 %v593
      %1019 = vmatmul.mubr.bf16.gmra.mrb[0].mxu0 %v592
      %v1020 = vpop.f32.mrb[0].mxu0
      %v1021 = vadd.f32 0.0, %v1020
      %v1022 = vpop.f32.mrb[0].mxu0
      %v1023 = vpop.f32.mrb[0].mxu0
      %v1024 = vadd.f32 0.0, %v1023
      %v1025 = vpop.f32.mrb[0].mxu0
      %1026 = vmatprep.mubr.bf16.mxu0 %v598
      %1027 = vmatmul.mubr.bf16.gmra.mrb[0].mxu0 %v597
      %v1028 = vpop.f32.mrb[0].mxu0
      %v1029 = vadd.f32 0.0, %v1028
      %v1030 = vpop.f32.mrb[0].mxu0
      %v1031 = vpop.f32.mrb[0].mxu0
      %v1032 = vadd.f32 0.0, %v1031
      %v1033 = vpop.f32.mrb[0].mxu0
      %1034 = vmatprep.mubr.bf16.mxu0 %v603
      %1035 = vmatmul.mubr.bf16.gmra.mrb[0].mxu0 %v602
      %v1036 = vpop.f32.mrb[0].mxu0
      %v1037 = vadd.f32 0.0, %v1036
      %v1038 = vpop.f32.mrb[0].mxu0
      %v1039 = vpop.f32.mrb[0].mxu0
      %v1040 = vadd.f32 0.0, %v1039
      %v1041 = vpop.f32.mrb[0].mxu0
      %1042 = vmatprep.mubr.bf16.mxu0 %v608
      %1043 = vmatmul.mubr.bf16.gmra.mrb[0].mxu0 %v607
      %v1044 = vpop.f32.mrb[0].mxu0
      %v1045 = vadd.f32 0.0, %v1044
      %v1046 = vpop.f32.mrb[0].mxu0
      %v1047 = vpop.f32.mrb[0].mxu0
      %v1048 = vadd.f32 0.0, %v1047
      %v1049 = vpop.f32.mrb[0].mxu0
      %1050 = vmatprep.mubr.bf16.mxu0 %v613
      %1051 = vmatmul.mubr.bf16.gmra.mrb[0].mxu0 %v612
      %v1052 = vpop.f32.mrb[0].mxu0
      %v1053 = vadd.f32 0.0, %v1052
      %v1054 = vpop.f32.mrb[0].mxu0
      %v1055 = vpop.f32.mrb[0].mxu0
      %v1056 = vpop.f32.mrb[0].mxu0
      %1057 = vdwg.mxu0
      %1058 = vmatprep.subr.bf16.mxu0 0
      %1059 = vmatpush1.bf16.msra.mxu0 %v858
      %1060 = vmatprep.subr.bf16.mxu0 0
      %1061 = vmatpush1.bf16.msra.mxu0 %v859
      %1062 = vmatprep.subr.bf16.mxu0 0
      %1063 = vmatpush1.bf16.msra.mxu0 %v860
      %1064 = vmatprep.subr.bf16.mxu0 0
      %1065 = vmatpush1.bf16.msra.mxu0 %v861
      %1066 = vmatprep.subr.bf16.mxu0 0
      %1067 = vmatpush1.bf16.msra.mxu0 %v862
      %1068 = vmatprep.subr.bf16.mxu0 0
      %1069 = vmatpush1.bf16.msra.mxu0 %v863
      %1070 = vmatprep.subr.bf16.mxu0 0
      %1071 = vmatpush1.bf16.msra.mxu0 %v864
      %1072 = vmatprep.subr.bf16.mxu0 0
      %1073 = vmatpush1.bf16.msra.mxu0 %v865
      %1074 = vmatprep.subr.bf16.mxu0 0
      %1075 = vmatpush1.bf16.msra.mxu0 %v866
      %1076 = vmatprep.subr.bf16.mxu0 0
      %1077 = vmatpush1.bf16.msra.mxu0 %v867
      %1078 = vmatprep.subr.bf16.mxu0 0
      %1079 = vmatpush1.bf16.msra.mxu0 %v868
      %1080 = vmatprep.subr.bf16.mxu0 0
      %1081 = vmatpush1.bf16.msra.mxu0 %v869
      %1082 = vmatprep.subr.bf16.mxu0 0
      %1083 = vmatpush1.bf16.msra.mxu0 %v870
      %1084 = vmatprep.subr.bf16.mxu0 0
      %1085 = vmatpush1.bf16.msra.mxu0 %v871
      %1086 = vmatprep.subr.bf16.mxu0 0
      %1087 = vmatpush1.bf16.msra.mxu0 %v872
      %1088 = vmatprep.subr.bf16.mxu0 0
      %1089 = vmatpush1.bf16.msra.mxu0 %v873
      %1090 = vmatprep.mubr.bf16.mxu0 %v555
      %1091 = vmatmul.mubr.bf16.gmra.mrb[0].mxu0 %v554
      %v1092 = vpop.f32.mrb[0].mxu0
      %v1093 = vadd.f32 %v957, %v1092
      %v1094 = vpop.f32.mrb[0].mxu0
      %v1095 = vpop.f32.mrb[0].mxu0
      %v1096 = vadd.f32 %v960, %v1095
      %v1097 = vpop.f32.mrb[0].mxu0
      %1098 = vmatprep.mubr.bf16.mxu0 %v560
      %1099 = vmatmul.mubr.bf16.gmra.mrb[0].mxu0 %v559
      %v1100 = vpop.f32.mrb[0].mxu0
      %v1101 = vadd.f32 %v965, %v1100
      %v1102 = vpop.f32.mrb[0].mxu0
      %v1103 = vpop.f32.mrb[0].mxu0
      %v1104 = vadd.f32 %v968, %v1103
      %v1105 = vpop.f32.mrb[0].mxu0
      %1106 = vmatprep.mubr.bf16.mxu0 %v565
      %1107 = vmatmul.mubr.bf16.gmra.mrb[0].mxu0 %v564
      %v1108 = vpop.f32.mrb[0].mxu0
      %v1109 = vadd.f32 %v973, %v1108
      %v1110 = vpop.f32.mrb[0].mxu0
      %v1111 = vpop.f32.mrb[0].mxu0
      %v1112 = vadd.f32 %v976, %v1111
      %v1113 = vpop.f32.mrb[0].mxu0
      %1114 = vmatprep.mubr.bf16.mxu0 %v570
      %1115 = vmatmul.mubr.bf16.gmra.mrb[0].mxu0 %v569
      %v1116 = vpop.f32.mrb[0].mxu0
      %v1117 = vadd.f32 %v981, %v1116
      %v1118 = vpop.f32.mrb[0].mxu0
      %v1119 = vpop.f32.mrb[0].mxu0
      %v1120 = vadd.f32 %v984, %v1119
      %v1121 = vpop.f32.mrb[0].mxu0
      %1122 = vmatprep.mubr.bf16.mxu0 %v575
      %1123 = vmatmul.mubr.bf16.gmra.mrb[0].mxu0 %v574
      %v1124 = vpop.f32.mrb[0].mxu0
      %v1125 = vadd.f32 %v989, %v1124
      %v1126 = vpop.f32.mrb[0].mxu0
      %v1127 = vpop.f32.mrb[0].mxu0
      %v1128 = vadd.f32 %v992, %v1127
      %v1129 = vpop.f32.mrb[0].mxu0
      %1130 = vmatprep.mubr.bf16.mxu0 %v580
      %1131 = vmatmul.mubr.bf16.gmra.mrb[0].mxu0 %v579
      %v1132 = vpop.f32.mrb[0].mxu0
      %v1133 = vadd.f32 %v997, %v1132
      %v1134 = vpop.f32.mrb[0].mxu0
      %v1135 = vpop.f32.mrb[0].mxu0
      %v1136 = vadd.f32 %v1000, %v1135
      %v1137 = vpop.f32.mrb[0].mxu0
      %1138 = vmatprep.mubr.bf16.mxu0 %v585
      %1139 = vmatmul.mubr.bf16.gmra.mrb[0].mxu0 %v584
      %v1140 = vpop.f32.mrb[0].mxu0
      %v1141 = vadd.f32 %v1005, %v1140
      %v1142 = vpop.f32.mrb[0].mxu0
      %v1143 = vpop.f32.mrb[0].mxu0
      %v1144 = vadd.f32 %v1008, %v1143
      %v1145 = vpop.f32.mrb[0].mxu0
      %1146 = vmatprep.mubr.bf16.mxu0 %v590
      %1147 = vmatmul.mubr.bf16.gmra.mrb[0].mxu0 %v589
      %v1148 = vpop.f32.mrb[0].mxu0
      %v1149 = vadd.f32 %v1013, %v1148
      %v1150 = vpop.f32.mrb[0].mxu0
      %v1151 = vpop.f32.mrb[0].mxu0
      %v1152 = vadd.f32 %v1016, %v1151
      %v1153 = vpop.f32.mrb[0].mxu0
      %1154 = vmatprep.mubr.bf16.mxu0 %v595
      %1155 = vmatmul.mubr.bf16.gmra.mrb[0].mxu0 %v594
      %v1156 = vpop.f32.mrb[0].mxu0
      %v1157 = vadd.f32 %v1021, %v1156
      %v1158 = vpop.f32.mrb[0].mxu0
      %v1159 = vpop.f32.mrb[0].mxu0
      %v1160 = vadd.f32 %v1024, %v1159
      %v1161 = vpop.f32.mrb[0].mxu0
      %1162 = vmatprep.mubr.bf16.mxu0 %v600
      %1163 = vmatmul.mubr.bf16.gmra.mrb[0].mxu0 %v599
      %v1164 = vpop.f32.mrb[0].mxu0
      %v1165 = vadd.f32 %v1029, %v1164
      %v1166 = vpop.f32.mrb[0].mxu0
      %v1167 = vpop.f32.mrb[0].mxu0
      %v1168 = vadd.f32 %v1032, %v1167
      %v1169 = vpop.f32.mrb[0].mxu0
      %1170 = vmatprep.mubr.bf16.mxu0 %v605
      %1171 = vmatmul.mubr.bf16.gmra.mrb[0].mxu0 %v604
      %v1172 = vpop.f32.mrb[0].mxu0
      %v1173 = vadd.f32 %v1037, %v1172
      %v1174 = vpop.f32.mrb[0].mxu0
      %v1175 = vpop.f32.mrb[0].mxu0
      %v1176 = vadd.f32 %v1040, %v1175
      %v1177 = vpop.f32.mrb[0].mxu0
      %1178 = vmatprep.mubr.bf16.mxu0 %v610
      %1179 = vmatmul.mubr.bf16.gmra.mrb[0].mxu0 %v609
      %v1180 = vpop.f32.mrb[0].mxu0
      %v1181 = vadd.f32 %v1045, %v1180
      %v1182 = vpop.f32.mrb[0].mxu0
      %v1183 = vpop.f32.mrb[0].mxu0
      %v1184 = vadd.f32 %v1048, %v1183
      %v1185 = vpop.f32.mrb[0].mxu0
      %1186 = vmatprep.mubr.bf16.mxu0 %v615
      %1187 = vmatmul.mubr.bf16.gmra.mrb[0].mxu0 %v614
      %v1188 = vpop.f32.mrb[0].mxu0
      %v1189 = vadd.f32 %v1053, %v1188
      %v1190 = vpop.f32.mrb[0].mxu0
      %v1191 = vpop.f32.mrb[0].mxu0
      %v1192 = vpop.f32.mrb[0].mxu0
      %1193 = vdwg.mxu0
      %1194 = vmatprep.subr.bf16.mxu0 0
      %1195 = vmatpush1.bf16.msra.mxu0 %v874
      %1196 = vmatprep.subr.bf16.mxu0 0
      %1197 = vmatpush1.bf16.msra.mxu0 %v875
      %1198 = vmatprep.subr.bf16.mxu0 0
      %1199 = vmatpush1.bf16.msra.mxu0 %v876
      %1200 = vmatprep.subr.bf16.mxu0 0
      %1201 = vmatpush1.bf16.msra.mxu0 %v877
      %1202 = vmatprep.subr.bf16.mxu0 0
      %1203 = vmatpush1.bf16.msra.mxu0 %v878
      %1204 = vmatprep.subr.bf16.mxu0 0
      %1205 = vmatpush1.bf16.msra.mxu0 %v879
      %1206 = vmatprep.subr.bf16.mxu0 0
      %1207 = vmatpush1.bf16.msra.mxu0 %v880
      %1208 = vmatprep.subr.bf16.mxu0 0
      %1209 = vmatpush1.bf16.msra.mxu0 %v881
      %1210 = vmatprep.subr.bf16.mxu0 0
      %1211 = vmatpush1.bf16.msra.mxu0 0
      %1212 = vmatprep.subr.bf16.mxu0 0
      %1213 = vmatpush1.bf16.msra.mxu0 0
      %1214 = vmatprep.subr.bf16.mxu0 0
      %1215 = vmatpush1.bf16.msra.mxu0 0
      %1216 = vmatprep.subr.bf16.mxu0 0
      %1217 = vmatpush1.bf16.msra.mxu0 0
      %1218 = vmatprep.subr.bf16.mxu0 0
      %1219 = vmatpush1.bf16.msra.mxu0 0
      %1220 = vmatprep.subr.bf16.mxu0 0
      %1221 = vmatpush1.bf16.msra.mxu0 0
      %1222 = vmatprep.subr.bf16.mxu0 0
      %1223 = vmatpush1.bf16.msra.mxu0 0
      %1224 = vmatprep.subr.bf16.mxu0 0
      %1225 = vmatpush1.bf16.msra.mxu0 0
      %1226 = vmatprep.mubr.bf16.mxu0 0
      %1227 = vmatmul.mubr.bf16.gmra.mrb[0].mxu0 %v556
      %v1228 = vpop.f32.mrb[0].mxu0
      %v1229 = vadd.f32 %v1093, %v1228
      %v1230 = vpop.f32.mrb[0].mxu0
      %v1231 = vpop.f32.mrb[0].mxu0
      %v1232 = vadd.f32 %v1096, %v1231
      %v1233 = vpop.f32.mrb[0].mxu0
      %1234 = vmatprep.mubr.bf16.mxu0 0
      %1235 = vmatmul.mubr.bf16.gmra.mrb[0].mxu0 %v561
      %v1236 = vpop.f32.mrb[0].mxu0
      %v1237 = vadd.f32 %v1101, %v1236
      %v1238 = vpop.f32.mrb[0].mxu0
      %v1239 = vpop.f32.mrb[0].mxu0
      %v1240 = vadd.f32 %v1104, %v1239
      %v1241 = vpop.f32.mrb[0].mxu0
      %1242 = vmatprep.mubr.bf16.mxu0 0
      %1243 = vmatmul.mubr.bf16.gmra.mrb[0].mxu0 %v566
      %v1244 = vpop.f32.mrb[0].mxu0
      %v1245 = vadd.f32 %v1109, %v1244
      %v1246 = vpop.f32.mrb[0].mxu0
      %v1247 = vpop.f32.mrb[0].mxu0
      %v1248 = vadd.f32 %v1112, %v1247
      %v1249 = vpop.f32.mrb[0].mxu0
      %1250 = vmatprep.mubr.bf16.mxu0 0
      %1251 = vmatmul.mubr.bf16.gmra.mrb[0].mxu0 %v571
      %v1252 = vpop.f32.mrb[0].mxu0
      %v1253 = vadd.f32 %v1117, %v1252
      %v1254 = vpop.f32.mrb[0].mxu0
      %v1255 = vpop.f32.mrb[0].mxu0
      %v1256 = vadd.f32 %v1120, %v1255
      %v1257 = vpop.f32.mrb[0].mxu0
      %1258 = vmatprep.mubr.bf16.mxu0 0
      %1259 = vmatmul.mubr.bf16.gmra.mrb[0].mxu0 %v576
      %v1260 = vpop.f32.mrb[0].mxu0
      %v1261 = vadd.f32 %v1125, %v1260
      %v1262 = vpop.f32.mrb[0].mxu0
      %v1263 = vpop.f32.mrb[0].mxu0
      %v1264 = vadd.f32 %v1128, %v1263
      %v1265 = vpop.f32.mrb[0].mxu0
      %1266 = vmatprep.mubr.bf16.mxu0 0
      %1267 = vmatmul.mubr.bf16.gmra.mrb[0].mxu0 %v581
      %v1268 = vpop.f32.mrb[0].mxu0
      %v1269 = vadd.f32 %v1133, %v1268
      %v1270 = vpop.f32.mrb[0].mxu0
      %v1271 = vpop.f32.mrb[0].mxu0
      %v1272 = vadd.f32 %v1136, %v1271
      %v1273 = vpop.f32.mrb[0].mxu0
      %1274 = vmatprep.mubr.bf16.mxu0 0
      %1275 = vmatmul.mubr.bf16.gmra.mrb[0].mxu0 %v586
      %v1276 = vpop.f32.mrb[0].mxu0
      %v1277 = vadd.f32 %v1141, %v1276
      %v1278 = vpop.f32.mrb[0].mxu0
      %v1279 = vpop.f32.mrb[0].mxu0
      %v1280 = vadd.f32 %v1144, %v1279
      %v1281 = vpop.f32.mrb[0].mxu0
      %1282 = vmatprep.mubr.bf16.mxu0 0
      %1283 = vmatmul.mubr.bf16.gmra.mrb[0].mxu0 %v591
      %v1284 = vpop.f32.mrb[0].mxu0
      %v1285 = vadd.f32 %v1149, %v1284
      %v1286 = vpop.f32.mrb[0].mxu0
      %v1287 = vpop.f32.mrb[0].mxu0
      %v1288 = vadd.f32 %v1152, %v1287
      %v1289 = vpop.f32.mrb[0].mxu0
      %1290 = vmatprep.mubr.bf16.mxu0 0
      %1291 = vmatmul.mubr.bf16.gmra.mrb[0].mxu0 %v596
      %v1292 = vpop.f32.mrb[0].mxu0
      %v1293 = vadd.f32 %v1157, %v1292
      %v1294 = vpop.f32.mrb[0].mxu0
      %v1295 = vpop.f32.mrb[0].mxu0
      %v1296 = vadd.f32 %v1160, %v1295
      %v1297 = vpop.f32.mrb[0].mxu0
      %1298 = vmatprep.mubr.bf16.mxu0 0
      %1299 = vmatmul.mubr.bf16.gmra.mrb[0].mxu0 %v601
      %v1300 = vpop.f32.mrb[0].mxu0
      %v1301 = vadd.f32 %v1165, %v1300
      %v1302 = vpop.f32.mrb[0].mxu0
      %v1303 = vpop.f32.mrb[0].mxu0
      %v1304 = vadd.f32 %v1168, %v1303
      %v1305 = vpop.f32.mrb[0].mxu0
      %1306 = vmatprep.mubr.bf16.mxu0 0
      %1307 = vmatmul.mubr.bf16.gmra.mrb[0].mxu0 %v606
      %v1308 = vpop.f32.mrb[0].mxu0
      %v1309 = vadd.f32 %v1173, %v1308
      %v1310 = vpop.f32.mrb[0].mxu0
      %v1311 = vpop.f32.mrb[0].mxu0
      %v1312 = vadd.f32 %v1176, %v1311
      %v1313 = vpop.f32.mrb[0].mxu0
      %1314 = vmatprep.mubr.bf16.mxu0 0
      %1315 = vmatmul.mubr.bf16.gmra.mrb[0].mxu0 %v611
      %v1316 = vpop.f32.mrb[0].mxu0
      %v1317 = vadd.f32 %v1181, %v1316
      %v1318 = vpop.f32.mrb[0].mxu0
      %v1319 = vpop.f32.mrb[0].mxu0
      %v1320 = vadd.f32 %v1184, %v1319
      %v1321 = vpop.f32.mrb[0].mxu0
      %1322 = vmatprep.mubr.bf16.mxu0 0
      %1323 = vmatmul.mubr.bf16.gmra.mrb[0].mxu0 %v616
      %v1324 = vpop.f32.mrb[0].mxu0
      %v1325 = vadd.f32 %v1189, %v1324
      %v1326 = vpop.f32.mrb[0].mxu0
      %v1327 = vpop.f32.mrb[0].mxu0
      %v1328 = vpop.f32.mrb[0].mxu0
      %1329 = vdwg.mxu0
      %v1330 = vld [vmem:[%s2] sm:$0xf]
      %v1331 = vpack.c.bf16 %v1232, %v1229
      %v1332 = vpack.c.bf16 %v1240, %v1237
      %v1333 = vpack.c.bf16 %v1248, %v1245
      %v1334 = vpack.c.bf16 %v1256, %v1253
      %v1335 = vpack.c.bf16 %v1264, %v1261
      %v1336 = vpack.c.bf16 %v1272, %v1269
      %v1337 = vpack.c.bf16 %v1280, %v1277
      %v1338 = vpack.c.bf16 %v1288, %v1285
      %v1339 = vpack.c.bf16 %v1296, %v1293
      %v1340 = vpack.c.bf16 %v1304, %v1301
      %v1341 = vpack.c.bf16 %v1312, %v1309
      %v1342 = vpack.c.bf16 %v1320, %v1317
      %v1343 = vpack.c.bf16 %v1325, %v1325
      %v1344 = vld [vmem:[%s3] sm:$0x1]
      %v1346 = vlaneseq
      %v1347 = vshrl.u32 %v1346, 7
      %v1348 = vsub.s32 0, %v1347
      %v1349 = vrot.slane %v1344, %v1348
      %v1353 = vunpack.c.l.s4 1983009808
      %v1354 = vunpack.c.0.s8 %v1353
      %v1355 = vlaneseq
      %v1356 = vshrl.u32 %v1355, 7
      %v1357 = vsub.s32 %v1354, %v1356
      %v1358 = vrot.slane %v1330, %v1357
      %v1359 = vcombine.high %v1358, %v1358
      %vm1361 = vcmask 588800
      %v1363 = vsel %vm1361, %v1359, 0
      %vm1365 = vcmask 1043456
      %v1367 = vsel %vm1365, %v1343, 0
      %1369 = vmatprep.subr.bf16.mxu0 0
      %1370 = vmatpush1.bf16.msra.mxu0 %v1331
      %1371 = vmatprep.subr.bf16.mxu0 0
      %1372 = vmatpush1.bf16.msra.mxu0 %v1332
      %1373 = vmatprep.subr.bf16.mxu0 0
      %1374 = vmatpush1.bf16.msra.mxu0 %v1333
      %1375 = vmatprep.subr.bf16.mxu0 0
      %1376 = vmatpush1.bf16.msra.mxu0 %v1334
      %1377 = vmatprep.subr.bf16.mxu0 0
      %1378 = vmatpush1.bf16.msra.mxu0 %v1335
      %1379 = vmatprep.subr.bf16.mxu0 0
      %1380 = vmatpush1.bf16.msra.mxu0 %v1336
      %1381 = vmatprep.subr.bf16.mxu0 0
      %1382 = vmatpush1.bf16.msra.mxu0 %v1337
      %1383 = vmatprep.subr.bf16.mxu0 0
      %1384 = vmatpush1.bf16.msra.mxu0 %v1338
      %1385 = vmatprep.subr.bf16.mxu0 0
      %1386 = vmatpush1.bf16.msra.mxu0 %v1339
      %1387 = vmatprep.subr.bf16.mxu0 0
      %1388 = vmatpush1.bf16.msra.mxu0 %v1340
      %1389 = vmatprep.subr.bf16.mxu0 0
      %1390 = vmatpush1.bf16.msra.mxu0 %v1341
      %1391 = vmatprep.subr.bf16.mxu0 0
      %1392 = vmatpush1.bf16.msra.mxu0 %v1342
      %1393 = vmatprep.subr.bf16.mxu0 0
      %1394 = vmatpush1.bf16.msra.mxu0 %v1367
      %1395 = vmatprep.subr.bf16.mxu0 0
      %1396 = vmatpush1.bf16.msra.mxu0 0
      %1397 = vmatprep.subr.bf16.mxu0 0
      %1398 = vmatpush1.bf16.msra.mxu0 0
      %1399 = vmatprep.subr.bf16.mxu0 0
      %1400 = vmatpush1.bf16.msra.mxu0 0
      %1401 = vmatprep.mubr.bf16.mxu0 %v1363
      %1402 = vmatmul.mubr.bf16.gmra.mrb[0].mxu0 %v1358
      %v1403 = vpop.f32.mrb[0].mxu0
      %v1404 = vadd.f32 %v1349, %v1403
      %v1405 = vpop.f32.mrb[0].mxu0
      %v1406 = vpop.f32.mrb[0].mxu0
      %v1407 = vpop.f32.mrb[0].mxu0
      %1408 = vdwg.mxu0
      %1409 = vst [vmem:[%s195] sm:$0xf] %v1404
      %p1410 = scmp.lt.s32.totalorder %s15, 1
      %s1411 = scalar_select %p1410, %s15, 1
      %s1412 = smul.addr %s1411, 4
      %s1413 = scalar_lea.vmem %s4, %s1412
      // Predicated region
      $region37: #{attention_forward.1} parent=35 // pred_check
        %p1414 = pneg %p122
      $region38: #{attention_forward.1} parent=35 // pred_check_branch
        %1416 = sbr.rel (%p1414) target = $region40
      $region39: #{attention_forward.1} parent=35 // pred_region
        _
      $region40: #{attention_forward.1} parent=35 // pred_fallthru
        _
    $region36: #{attention_forward.1} parent=5 // pred_fallthru
      _
    %p1417 = scmp.le.s32.totalorder 2, %s10
    // Predicated region
    $region41: #{attention_forward.1} parent=5 // pred_check
      %p1418 = pneg %p1417
    $region42: #{attention_forward.1} parent=5 // pred_check_branch
      %1420 = sbr.rel (%p1418) target = $region44
    $region43: #{attention_forward.1} parent=5 // pred_region
      %s1421 = ssub.s32 %s10, 2
      // Predicated region
      $region45: #{attention_forward.1} parent=43 // pred_check
        %p1422 = pneg %p128
      $region46: #{attention_forward.1} parent=43 // pred_check_branch
        %1424 = sbr.rel (%p1422) target = $region48
      $region47: #{attention_forward.1} parent=43 // pred_region
        %p1425 = scmp.lt.s32.totalorder %s16, 1
        %s1426 = scalar_select %p1425, %s16, 1
        %s1427 = smul.addr %s1426, 4
        %s1428 = scalar_lea.vmem %s4, %s1427
      $region48: #{attention_forward.1} parent=43 // pred_fallthru
        _
    $region44: #{attention_forward.1} parent=5 // pred_fallthru
      _
  $region6: #{attention_forward.1} parent=0 // loop_footer
    %s14 = sadd.s32 1, %s10
  $region7: #{attention_forward.1} parent=0 // loop_footer_branch
    %9 = sbr.rel target = $region3
  $region8: #{attention_forward.1} parent=0 // loop_exit
    _

</llo_original>
